<compile_context>
chip_gen: v5e
topology: v5e:2x2
jax: 0.10.0
libtpu: 0.0.40
codegen_flags: <defaults>
</compile_context>

<pallas_src>
import functools
import math
from functools import partial

import jax
import jax.numpy as jnp
from jax.experimental import pallas as pl
from jax.experimental.pallas import tpu as pltpu


_LANE = 128     # last-dim tiling requirement
_SUBLANE = 16   # covers f32 (8) and bf16 (16) sublane packing


def _round_up(x: int, m: int) -> int:
    return ((x + m - 1) // m) * m


def _gelu_tanh(x):
    # PyTorch F.gelu(x, approximate='tanh'):
    # 0.5 * x * (1 + tanh(sqrt(2/pi) * (x + 0.044715 * x**3)))
    c = math.sqrt(2.0 / math.pi)
    return 0.5 * x * (1.0 + jnp.tanh(c * (x + 0.044715 * x * x * x)))


def mlp_kernel(x_ref, w1t_ref, w2t_ref, o_ref, acc_ref):
    # x_ref:   [TM, DIM]   activation tile (row block i, resident across k)
    # w1t_ref: [DIM, TN]   column block k of w1.T
    # w2t_ref: [TN, DIM]   row    block k of w2.T
    # o_ref:   [TM, DIM]   output tile (same block across k)
    # acc_ref: [TM, DIM]   f32 VMEM accumulator
    k = pl.program_id(1)

    @pl.when(k == 0)
    def _():
        acc_ref[...] = jnp.zeros_like(acc_ref)

    # Cast activations to the weight dtype (bf16 by default) -> bf16 MXU rate.
    h = jnp.dot(x_ref[...].astype(w1t_ref.dtype), w1t_ref[...],
                preferred_element_type=jnp.float32)
    h = _gelu_tanh(h)
    acc_ref[...] += jnp.dot(h.astype(w2t_ref.dtype), w2t_ref[...],
                            preferred_element_type=jnp.float32)

    @pl.when(k == pl.num_programs(1) - 1)
    def _():
        o_ref[...] = acc_ref[...].astype(o_ref.dtype)


@functools.lru_cache(maxsize=1)
def _vmem_budget_bytes() -> int:
    """~75% of physical VMEM (48 MiB v7x, 96 MiB v5e/v6e); safe fallback."""
    try:
        cap = int(pltpu.get_tpu_info().vmem_capacity_bytes)
    except Exception:
        cap = 64 * 1024 * 1024  # conservative: v7x physical capacity
    return (cap * 3) // 4


def prepare_weights(w1, w2, *, dtype=jnp.bfloat16, inter_tile: int = 512):
    """Hoisted (call once at init): transpose + pad + cast nn.Linear weights.

    w1: [inter_dim, dim], w2: [dim, inter_dim]  (nn.Linear conventions)
    The inter dim is padded to a multiple of `inter_tile` so TN never has to
    shrink for divisibility; feature dim padded to a lane multiple.
    Returns w1t: [dim_pad, inter_pad], w2t: [inter_pad, dim_pad] in `dtype`.
    """
    inter_dim, dim = w1.shape
    inter_tile = max(_LANE, _round_up(inter_tile, _LANE))
    dim_pad = _round_up(dim, _LANE)
    inter_pad = _round_up(inter_dim, inter_tile)
    w1t = jnp.pad(w1.T, ((0, dim_pad - dim), (0, inter_pad - inter_dim)))
    w2t = jnp.pad(w2.T, ((0, inter_pad - inter_dim), (0, dim_pad - dim)))
    return w1t.astype(dtype), w2t.astype(dtype)


def _derive_tiles(m, dim_pad, inter_pad, x_bytes, w_bytes, out_bytes,
                  tm, tn, budget):
    """Pick (TM, TN) that fit the VMEM budget and keep both TCs busy."""
    # TN: multiple of 128 that divides inter_pad.
    tn = min(tn, inter_pad)
    tn = max(_LANE, (tn // _LANE) * _LANE)
    while inter_pad % tn != 0:
        tn -= _LANE
    # TM: clamp to the row count, keep a sublane-friendly multiple.
    tm = min(tm, _round_up(m, _SUBLANE))
    tm = max(_SUBLANE, (tm // _SUBLANE) * _SUBLANE)

    def vmem_need(tm_, tn_):
        return (2 * tm_ * dim_pad * x_bytes        # x tiles (double-buffered)
                + 2 * dim_pad * tn_ * w_bytes      # w1t tiles
                + 2 * tn_ * dim_pad * w_bytes      # w2t tiles
                + 2 * tm_ * dim_pad * out_bytes    # out tiles
                + tm_ * dim_pad * 4                # f32 accumulator scratch
                + 4 * tm_ * tn_ * 4)               # h / gelu / cast temporaries

    while vmem_need(tm, tn) > budget:
        if tn > 256:
            tn //= 2
            while inter_pad % tn != 0:
                tn -= _LANE
        elif tm > 128:
            tm = max(_SUBLANE, ((tm // 2) // _SUBLANE) * _SUBLANE)
        elif tn > _LANE:
            tn //= 2
            while inter_pad % tn != 0:
                tn -= _LANE
        elif tm > _SUBLANE:
            tm = max(_SUBLANE, ((tm // 2) // _SUBLANE) * _SUBLANE)
        else:
            break

    # Megacore: make sure the "parallel" M axis has >= 2 blocks when possible.
    m_pad = _round_up(m, tm)
    if m_pad // tm < 2 and tm >= 2 * _SUBLANE:
        tm = max(_SUBLANE, ((tm // 2) // _SUBLANE) * _SUBLANE)
    return tm, tn


@partial(jax.jit, static_argnames=("tm", "tn", "vmem_limit"))
def _mlp_forward_impl(x, w1t, w2t, *, tm, tn, vmem_limit):
    orig_shape = x.shape
    dim = orig_shape[-1]
    dim_pad, inter_pad = w1t.shape
    assert w2t.shape == (inter_pad, dim_pad)

    x2d = x.reshape(-1, dim)
    m = x2d.shape[0]

    tm_eff, tn_eff = _derive_tiles(
        m, dim_pad, inter_pad,
        x_bytes=x.dtype.itemsize, w_bytes=w1t.dtype.itemsize,
        out_bytes=x.dtype.itemsize, tm=tm, tn=tn, budget=vmem_limit)

    m_pad = _round_up(m, tm_eff)
    if m_pad != m or dim_pad != dim:
        x_pad = jnp.pad(x2d, ((0, m_pad - m), (0, dim_pad - dim)))
    else:
        x_pad = x2d

    grid = (m_pad // tm_eff, inter_pad // tn_eff)
    m_blocks = grid[0]

    w_stream_bytes = (w1t.size * w1t.dtype.itemsize
                      + w2t.size * w2t.dtype.itemsize)
    cost = pl.CostEstimate(
        flops=4 * m_pad * dim_pad * inter_pad,
        transcendentals=m_pad * inter_pad,
        bytes_accessed=(x_pad.size * x_pad.dtype.itemsize
                        + m_blocks * w_stream_bytes          # weight re-streaming
                        + m_pad * dim_pad * x.dtype.itemsize),
    )

    out = pl.pallas_call(
        mlp_kernel,
        out_shape=jax.ShapeDtypeStruct((m_pad, dim_pad), x.dtype),
        grid_spec=pltpu.PrefetchScalarGridSpec(
            num_scalar_prefetch=0,
            grid=grid,
            in_specs=[
                pl.BlockSpec((tm_eff, dim_pad), lambda i, k: (i, 0)),
                pl.BlockSpec((dim_pad, tn_eff), lambda i, k: (0, k)),
                pl.BlockSpec((tn_eff, dim_pad), lambda i, k: (k, 0)),
            ],
            out_specs=pl.BlockSpec((tm_eff, dim_pad), lambda i, k: (i, 0)),
            scratch_shapes=[pltpu.VMEM((tm_eff, dim_pad), jnp.float32)],
        ),
        compiler_params=pltpu.CompilerParams(
            dimension_semantics=("parallel", "arbitrary"),
            vmem_limit_bytes=vmem_limit,
        ),
        cost_estimate=cost,
    )(x_pad, w1t, w2t)

    if m_pad != m or dim_pad != dim:
        out = out[:m, :dim]
    return out.reshape(orig_shape)


def mlp_forward(x, w1t, w2t, *, tm: int | None = None, tn: int = 512):
    """x: [..., dim]; w1t/w2t: pre-transposed/padded/cast (prepare_weights)."""
    budget = _vmem_budget_bytes()
    if tm is None:
        # 128-MiB-VMEM parts (v5e/v6e): bigger TM halves weight re-streaming.
        tm = 512 if budget >= 90 * 1024 * 1024 else 256
    return _mlp_forward_impl(x, w1t, w2t, tm=tm, tn=tn, vmem_limit=budget)


def _ref_mlp(x, w1, w2):
    h = x @ w1.T
    c = math.sqrt(2.0 / math.pi)
    h = 0.5 * h * (1.0 + jnp.tanh(c * (h + 0.044715 * h ** 3)))
    return h @ w2.T


if __name__ == "__main__":
    dim = 4
    inter_dim = 16
    batch, seq = 2, 8

    key = jax.random.PRNGKey(0)
    kx, k1, k2 = jax.random.split(key, 3)

    # Deterministic parameter init (nn.Linear-style uniform bounds).
    bound1 = 1.0 / math.sqrt(dim)
    bound2 = 1.0 / math.sqrt(inter_dim)
    w1 = jax.random.uniform(k1, (inter_dim, dim), jnp.float32, -bound1, bound1)
    w2 = jax.random.uniform(k2, (dim, inter_dim), jnp.float32, -bound2, bound2)

    x = jax.random.normal(kx, (batch, seq, dim), jnp.float32)

    # Transpose/pad/cast once at init time (hoisted out of the forward path).
    w1t, w2t = prepare_weights(w1, w2)          # bf16 weights by default
    w1t, w2t = jax.block_until_ready((w1t, w2t))

    y = mlp_forward(x, w1t, w2t)
    y = jax.block_until_ready(y)

    y_ref = _ref_mlp(x, w1, w2)
    assert y.shape == x.shape
    # bf16 MXU path vs f32 reference: loosen tolerance accordingly.
    assert jnp.allclose(y, y_ref, atol=3e-2, rtol=3e-2), (
        float(jnp.max(jnp.abs(y - y_ref))))

    print("KERNEL_OK")
</pallas_src>

<mosaic_0001>
module attributes {stable_mosaic.version = 11 : i64} {
  func.func @mlp_kernel(%arg0: i32, %arg1: i32, %arg2: memref<16x128xf32, #tpu.memory_space<vmem>>, %arg3: memref<128x512xbf16, #tpu.memory_space<vmem>>, %arg4: memref<512x128xbf16, #tpu.memory_space<vmem>>, %arg5: memref<16x128xf32, #tpu.memory_space<vmem>>, %arg6: memref<16x128xf32, #tpu.memory_space<vmem>>) attributes {dimension_semantics = [#tpu.dimension_semantics<parallel>, #tpu.dimension_semantics<arbitrary>], iteration_bounds = array<i64: 1, 1>, scalar_prefetch = 0 : i64, scratch_operands = 1 : i64, tpu.core_type = #tpu.core_type<tc>, window_params = [{transform_indices = @transform_0, window_bounds = array<i64: 16, 128>}, {transform_indices = @transform_1, window_bounds = array<i64: 128, 512>}, {transform_indices = @transform_2, window_bounds = array<i64: 512, 128>}, {transform_indices = @transform_3, window_bounds = array<i64: 16, 128>}]} {
    %c0_i32 = arith.constant 0 : i32
    %0 = arith.cmpi eq, %arg1, %c0_i32 : i32
    %1 = arith.extui %0 : i1 to i32
    %c0_i32_0 = arith.constant 0 : i32
    %2 = arith.cmpi ne, %1, %c0_i32_0 : i32
    scf.if %2 {
      %cst_17 = arith.constant 0.000000e+00 : f32
      %29 = vector.broadcast %cst_17 : f32 to vector<16x128xf32>
      %c0_18 = arith.constant 0 : index
      %c0_19 = arith.constant 0 : index
      %30 = vector.load %arg6[%c0_18, %c0_19] : memref<16x128xf32, #tpu.memory_space<vmem>>, vector<16x128xf32>
      tpu.vector_store %arg6[%c0_18, %c0_19], %29 {strides = array<i32>} : memref<16x128xf32, #tpu.memory_space<vmem>>, vector<16x128xf32>,
    } else {
    }
    %c0 = arith.constant 0 : index
    %c0_1 = arith.constant 0 : index
    %3 = vector.load %arg2[%c0, %c0_1] : memref<16x128xf32, #tpu.memory_space<vmem>>, vector<16x128xf32>
    %4 = arith.truncf %3 : vector<16x128xf32> to vector<16x128xbf16>
    %c0_2 = arith.constant 0 : index
    %c0_3 = arith.constant 0 : index
    %5 = vector.load %arg3[%c0_2, %c0_3] : memref<128x512xbf16, #tpu.memory_space<vmem>>, vector<128x512xbf16>
    %cst = arith.constant dense<0.000000e+00> : vector<16x512xf32>
    %6 = tpu.matmul %4, %5, %cst {dimension_numbers = #tpu.dot_dimension_numbers<[1], [0], [0], [1], [0, 0, 1, 1], [], []>} : vector<16x128xbf16>, vector<128x512xbf16>, vector<16x512xf32> -> vector<16x512xf32>
    %cst_4 = arith.constant 5.000000e-01 : f32
    %7 = vector.broadcast %cst_4 : f32 to vector<16x512xf32>
    %8 = arith.mulf %7, %6 : vector<16x512xf32>
    %cst_5 = arith.constant 4.471500e-02 : f32
    %9 = vector.broadcast %cst_5 : f32 to vector<16x512xf32>
    %10 = arith.mulf %9, %6 : vector<16x512xf32>
    %11 = arith.mulf %10, %6 : vector<16x512xf32>
    %12 = arith.mulf %11, %6 : vector<16x512xf32>
    %13 = arith.addf %6, %12 : vector<16x512xf32>
    %cst_6 = arith.constant 0.797884583 : f32
    %14 = vector.broadcast %cst_6 : f32 to vector<16x512xf32>
    %15 = arith.mulf %14, %13 : vector<16x512xf32>
    %16 = math.tanh %15 : vector<16x512xf32>
    %cst_7 = arith.constant 1.000000e+00 : f32
    %17 = vector.broadcast %cst_7 : f32 to vector<16x512xf32>
    %18 = arith.addf %17, %16 : vector<16x512xf32>
    %19 = arith.mulf %8, %18 : vector<16x512xf32>
    %c0_8 = arith.constant 0 : index
    %c0_9 = arith.constant 0 : index
    %20 = vector.load %arg6[%c0_8, %c0_9] : memref<16x128xf32, #tpu.memory_space<vmem>>, vector<16x128xf32>
    %21 = arith.truncf %19 : vector<16x512xf32> to vector<16x512xbf16>
    %c0_10 = arith.constant 0 : index
    %c0_11 = arith.constant 0 : index
    %22 = vector.load %arg4[%c0_10, %c0_11] : memref<512x128xbf16, #tpu.memory_space<vmem>>, vector<512x128xbf16>
    %cst_12 = arith.constant dense<0.000000e+00> : vector<16x128xf32>
    %23 = tpu.matmul %21, %22, %cst_12 {dimension_numbers = #tpu.dot_dimension_numbers<[1], [0], [0], [1], [0, 0, 1, 1], [], []>} : vector<16x512xbf16>, vector<512x128xbf16>, vector<16x128xf32> -> vector<16x128xf32>
    %24 = arith.addf %20, %23 : vector<16x128xf32>
    %c0_13 = arith.constant 0 : index
    %c0_14 = arith.constant 0 : index
    %25 = vector.load %arg6[%c0_13, %c0_14] : memref<16x128xf32, #tpu.memory_space<vmem>>, vector<16x128xf32>
    tpu.vector_store %arg6[%c0_13, %c0_14], %24 {strides = array<i32>} : memref<16x128xf32, #tpu.memory_space<vmem>>, vector<16x128xf32>,
    %c0_i32_15 = arith.constant 0 : i32
    %26 = arith.cmpi eq, %arg1, %c0_i32_15 : i32
    %27 = arith.extui %26 : i1 to i32
    %c0_i32_16 = arith.constant 0 : i32
    %28 = arith.cmpi ne, %27, %c0_i32_16 : i32
    scf.if %28 {
      %c0_17 = arith.constant 0 : index
      %c0_18 = arith.constant 0 : index
      %29 = vector.load %arg6[%c0_17, %c0_18] : memref<16x128xf32, #tpu.memory_space<vmem>>, vector<16x128xf32>
      %c0_19 = arith.constant 0 : index
      %c0_20 = arith.constant 0 : index
      %30 = vector.load %arg5[%c0_19, %c0_20] : memref<16x128xf32, #tpu.memory_space<vmem>>, vector<16x128xf32>
      tpu.vector_store %arg5[%c0_19, %c0_20], %29 {strides = array<i32>} : memref<16x128xf32, #tpu.memory_space<vmem>>, vector<16x128xf32>,
    } else {
    }
    return
  }
  func.func @transform_0(%arg0: i32, %arg1: i32) -> (i32, i32) {
    %c0_i32 = arith.constant 0 : i32
    %c0_i32_0 = arith.constant 0 : i32
    return %arg0, %c0_i32 : i32, i32
  }
  func.func @transform_1(%arg0: i32, %arg1: i32) -> (i32, i32) {
    %c0_i32 = arith.constant 0 : i32
    %c0_i32_0 = arith.constant 0 : i32
    return %c0_i32, %arg1 : i32, i32
  }
  func.func @transform_2(%arg0: i32, %arg1: i32) -> (i32, i32) {
    %c0_i32 = arith.constant 0 : i32
    %c0_i32_0 = arith.constant 0 : i32
    return %arg1, %c0_i32 : i32, i32
  }
  func.func @transform_3(%arg0: i32, %arg1: i32) -> (i32, i32) {
    %c0_i32 = arith.constant 0 : i32
    %c0_i32_0 = arith.constant 0 : i32
    return %arg0, %c0_i32 : i32, i32
  }
}

</mosaic_0001>

<llo_original>
// kernel: _mlp_forward_impl.1
$region0: #{_mlp_forward_impl.1}
  #allocation0 [shape = 'u32[]', space=smem, size = 0x4, offset = 0x4, fixed_abs, tag = 'smem constant byte address 0x4 - core index']
  #allocation1 [shape = 'u32[72,128]{1,0:T(1,128)}', space=vmem, size = 0x9000, scoped, tag = 'internal scratch']
  #allocation2 [shape = 'f32[16,128]{1,0:T(8,128)}', space=vmem, size = 0x2000, scoped, tag = 'scratch operand']
  %s0 = inlined_call_operand.vmem [shape: f32[16,128], index: 0, kind: input, shape index: {}]
  %s1 = inlined_call_operand.hbm [shape: bf16[128,512], index: 1, kind: input, shape index: {}]
  %s2 = inlined_call_operand.hbm [shape: bf16[512,128], index: 2, kind: input, shape index: {}]
  %s3 = inlined_call_operand.vmem [shape: f32[16,128], index: 3, kind: output, shape index: {}]
  %s4 = sld [smem:[#allocation0]]
  $region38: #{_mlp_forward_impl.1} parent=0
    _
  %s6 = ssub.s32 1, %s4
  %s7 = scalar_select 0, %s6, %s4
  $region1: #{_mlp_forward_impl.1} parent=0
    #allocation3 [shape = 'u8[131072]{0}', space=vmem, size = 0x20000, scoped, tag = 'input window, operand 1, single buffered']
    #allocation4 [shape = 's32[1]{0}', space=sflag, size = 0x4, scoped, tag = 'scoped memory for _mlp_forward_impl.1']
    #allocation5 [shape = 'u8[131072]{0}', space=vmem, size = 0x20000, scoped, tag = 'input window, operand 2, single buffered']
    #allocation6 [shape = 's32[1]{0}', space=sflag, size = 0x4, scoped, tag = 'scoped memory for _mlp_forward_impl.1']
    %8 = vsyncpa [#allocation4], 0
    %9 = vsyncpa [#allocation6], 0
    // Predicated region
    $region2: #{_mlp_forward_impl.1} parent=1 // pred_check
      _
    $region3: #{_mlp_forward_impl.1} parent=1 // pred_check_branch
      %11 = sbr.rel (0) target = $region5
    $region4: #{_mlp_forward_impl.1} parent=1 // pred_region
      _
    $region5: #{_mlp_forward_impl.1} parent=1 // pred_fallthru
      _
    // Predicated region
    $region6: #{_mlp_forward_impl.1} parent=1 // pred_check
      _
    $region7: #{_mlp_forward_impl.1} parent=1 // pred_check_branch
      %13 = sbr.rel (0) target = $region9
    $region8: #{_mlp_forward_impl.1} parent=1 // pred_region
      %15 = vsyncadd [#allocation4], 0
      %s16 = sshll.u32 %s1, 4
      %s17 = int_to_ptr.hbm [resolvable:$true] %s16
      %s18 = sshll.u32 [#allocation3], 4
      %s19 = int_to_ptr.vmem [resolvable:$true] %s18
      %24 = dma.hbm_to_vmem [thread:$0]  %s17, 4096, %s19, [#allocation4], 256, 256, 16
    $region9: #{_mlp_forward_impl.1} parent=1 // pred_fallthru
      _
    // Predicated region
    $region10: #{_mlp_forward_impl.1} parent=1 // pred_check
      _
    $region11: #{_mlp_forward_impl.1} parent=1 // pred_check_branch
      %26 = sbr.rel (0) target = $region13
    $region12: #{_mlp_forward_impl.1} parent=1 // pred_region
      %28 = vsyncadd [#allocation6], 0
      %s29 = sshll.u32 %s2, 4
      %s30 = int_to_ptr.hbm [resolvable:$true] %s29
      %s31 = sshll.u32 [#allocation5], 4
      %s32 = int_to_ptr.vmem [resolvable:$true] %s31
      %37 = dma.hbm_to_vmem [thread:$0]  %s30, 4096, %s32, [#allocation6], 64, 64, 4
    $region13: #{_mlp_forward_impl.1} parent=1 // pred_fallthru
      _
    // Predicated region
    $region14: #{_mlp_forward_impl.1} parent=1 // pred_check
      _
    $region15: #{_mlp_forward_impl.1} parent=1 // pred_check_branch
      %39 = sbr.rel (0) target = $region17
    $region16: #{_mlp_forward_impl.1} parent=1 // pred_region
      %41 = dma.done [#allocation4], 4096
    $region17: #{_mlp_forward_impl.1} parent=1 // pred_fallthru
      _
    // Predicated region
    $region18: #{_mlp_forward_impl.1} parent=1 // pred_check
      _
    $region19: #{_mlp_forward_impl.1} parent=1 // pred_check_branch
      %43 = sbr.rel (0) target = $region21
    $region20: #{_mlp_forward_impl.1} parent=1 // pred_region
      %45 = dma.done [#allocation6], 4096
    $region21: #{_mlp_forward_impl.1} parent=1 // pred_fallthru
      _
    %p46 = scmp.eq.s32.totalorder 0, 0
    // Predicated region
    $region22: #{_mlp_forward_impl.1} parent=1 // pred_check
      %p47 = pneg %p46
    $region23: #{_mlp_forward_impl.1} parent=1 // pred_check_branch
      %49 = sbr.rel (%p47) target = $region25
    $region24: #{_mlp_forward_impl.1} parent=1 // pred_region
      %50 = vst [vmem:[#allocation2] sm:$0xff] 0.0
      %51 = vst [vmem:[#allocation2 + $0x8] sm:$0xff] 0.0
    $region25: #{_mlp_forward_impl.1} parent=1 // pred_fallthru
      _
    %v52 = vld [vmem:[%s0] sm:$0xff]
    %v53 = vld [vmem:[%s0 + $0x8] sm:$0xff]
    %v54 = vpack.c.bf16 %v53, %v52
    %v55 = vld [vmem:[#allocation3] sm:$0xff]
    %v56 = vld [vmem:[#allocation3 + $0x8] sm:$0xff]
    %v57 = vld [vmem:[#allocation3 + $0x10] sm:$0xff]
    %v58 = vld [vmem:[#allocation3 + $0x18] sm:$0xff]
    %v59 = vld [vmem:[#allocation3 + $0x20] sm:$0xff]
    %v60 = vld [vmem:[#allocation3 + $0x28] sm:$0xff]
    %v61 = vld [vmem:[#allocation3 + $0x30] sm:$0xff]
    %v62 = vld [vmem:[#allocation3 + $0x38] sm:$0xff]
    %v63 = vld [vmem:[#allocation3 + $0x40] sm:$0xff]
    %v64 = vld [vmem:[#allocation3 + $0x48] sm:$0xff]
    %v65 = vld [vmem:[#allocation3 + $0x50] sm:$0xff]
    %v66 = vld [vmem:[#allocation3 + $0x58] sm:$0xff]
    %v67 = vld [vmem:[#allocation3 + $0x60] sm:$0xff]
    %v68 = vld [vmem:[#allocation3 + $0x68] sm:$0xff]
    %v69 = vld [vmem:[#allocation3 + $0x70] sm:$0xff]
    %v70 = vld [vmem:[#allocation3 + $0x78] sm:$0xff]
    %v71 = vld [vmem:[#allocation3 + $0x80] sm:$0xff]
    %v72 = vld [vmem:[#allocation3 + $0x88] sm:$0xff]
    %v73 = vld [vmem:[#allocation3 + $0x90] sm:$0xff]
    %v74 = vld [vmem:[#allocation3 + $0x98] sm:$0xff]
    %v75 = vld [vmem:[#allocation3 + $0xa0] sm:$0xff]
    %v76 = vld [vmem:[#allocation3 + $0xa8] sm:$0xff]
    %v77 = vld [vmem:[#allocation3 + $0xb0] sm:$0xff]
    %v78 = vld [vmem:[#allocation3 + $0xb8] sm:$0xff]
    %v79 = vld [vmem:[#allocation3 + $0xc0] sm:$0xff]
    %v80 = vld [vmem:[#allocation3 + $0xc8] sm:$0xff]
    %v81 = vld [vmem:[#allocation3 + $0xd0] sm:$0xff]
    %v82 = vld [vmem:[#allocation3 + $0xd8] sm:$0xff]
    %v83 = vld [vmem:[#allocation3 + $0xe0] sm:$0xff]
    %v84 = vld [vmem:[#allocation3 + $0xe8] sm:$0xff]
    %v85 = vld [vmem:[#allocation3 + $0xf0] sm:$0xff]
    %v86 = vld [vmem:[#allocation3 + $0xf8] sm:$0xff]
    %v119 = vunpack.c.l.b16 %v55
    %v120 = vunpack.c.h.b16 %v55
    %v121 = vunpack.c.l.b16 %v56
    %v122 = vunpack.c.h.b16 %v56
    %v123 = vunpack.c.l.b16 %v57
    %v124 = vunpack.c.h.b16 %v57
    %v125 = vunpack.c.l.b16 %v58
    %v126 = vunpack.c.h.b16 %v58
    %v127 = vunpack.c.l.b16 %v59
    %v128 = vunpack.c.h.b16 %v59
    %v129 = vunpack.c.l.b16 %v60
    %v130 = vunpack.c.h.b16 %v60
    %v131 = vunpack.c.l.b16 %v61
    %v132 = vunpack.c.h.b16 %v61
    %v133 = vunpack.c.l.b16 %v62
    %v134 = vunpack.c.h.b16 %v62
    %v135 = vunpack.c.l.b16 %v63
    %v136 = vunpack.c.h.b16 %v63
    %v137 = vunpack.c.l.b16 %v64
    %v138 = vunpack.c.h.b16 %v64
    %v139 = vunpack.c.l.b16 %v65
    %v140 = vunpack.c.h.b16 %v65
    %v141 = vunpack.c.l.b16 %v66
    %v142 = vunpack.c.h.b16 %v66
    %v143 = vunpack.c.l.b16 %v67
    %v144 = vunpack.c.h.b16 %v67
    %v145 = vunpack.c.l.b16 %v68
    %v146 = vunpack.c.h.b16 %v68
    %v147 = vunpack.c.l.b16 %v69
    %v148 = vunpack.c.h.b16 %v69
    %v149 = vunpack.c.l.b16 %v70
    %v150 = vunpack.c.h.b16 %v70
    %v151 = vunpack.c.l.b16 %v71
    %v152 = vunpack.c.h.b16 %v71
    %v153 = vunpack.c.l.b16 %v72
    %v154 = vunpack.c.h.b16 %v72
    %v155 = vunpack.c.l.b16 %v73
    %v156 = vunpack.c.h.b16 %v73
    %v157 = vunpack.c.l.b16 %v74
    %v158 = vunpack.c.h.b16 %v74
    %v159 = vunpack.c.l.b16 %v75
    %v160 = vunpack.c.h.b16 %v75
    %v161 = vunpack.c.l.b16 %v76
    %v162 = vunpack.c.h.b16 %v76
    %v163 = vunpack.c.l.b16 %v77
    %v164 = vunpack.c.h.b16 %v77
    %v165 = vunpack.c.l.b16 %v78
    %v166 = vunpack.c.h.b16 %v78
    %v167 = vunpack.c.l.b16 %v79
    %v168 = vunpack.c.h.b16 %v79
    %v169 = vunpack.c.l.b16 %v80
    %v170 = vunpack.c.h.b16 %v80
    %v171 = vunpack.c.l.b16 %v81
    %v172 = vunpack.c.h.b16 %v81
    %v173 = vunpack.c.l.b16 %v82
    %v174 = vunpack.c.h.b16 %v82
    %v175 = vunpack.c.l.b16 %v83
    %v176 = vunpack.c.h.b16 %v83
    %v177 = vunpack.c.l.b16 %v84
    %v178 = vunpack.c.h.b16 %v84
    %v179 = vunpack.c.l.b16 %v85
    %v180 = vunpack.c.h.b16 %v85
    %v181 = vunpack.c.l.b16 %v86
    %v182 = vunpack.c.h.b16 %v86
    %v183 = vpack.c.b16 %v123, %v119
    %v184 = vpack.c.b16 %v124, %v120
    %v185 = vpack.c.b16 %v125, %v121
    %v186 = vpack.c.b16 %v126, %v122
    %v187 = vpack.c.b16 %v131, %v127
    %v188 = vpack.c.b16 %v132, %v128
    %v189 = vpack.c.b16 %v133, %v129
    %v190 = vpack.c.b16 %v134, %v130
    %v191 = vpack.c.b16 %v139, %v135
    %v192 = vpack.c.b16 %v140, %v136
    %v193 = vpack.c.b16 %v141, %v137
    %v194 = vpack.c.b16 %v142, %v138
    %v195 = vpack.c.b16 %v147, %v143
    %v196 = vpack.c.b16 %v148, %v144
    %v197 = vpack.c.b16 %v149, %v145
    %v198 = vpack.c.b16 %v150, %v146
    %v199 = vpack.c.b16 %v155, %v151
    %v200 = vpack.c.b16 %v156, %v152
    %v201 = vpack.c.b16 %v157, %v153
    %v202 = vpack.c.b16 %v158, %v154
    %v203 = vpack.c.b16 %v163, %v159
    %v204 = vpack.c.b16 %v164, %v160
    %v205 = vpack.c.b16 %v165, %v161
    %v206 = vpack.c.b16 %v166, %v162
    %v207 = vpack.c.b16 %v171, %v167
    %v208 = vpack.c.b16 %v172, %v168
    %v209 = vpack.c.b16 %v173, %v169
    %v210 = vpack.c.b16 %v174, %v170
    %v211 = vpack.c.b16 %v179, %v175
    %v212 = vpack.c.b16 %v180, %v176
    %v213 = vpack.c.b16 %v181, %v177
    %v214 = vpack.c.b16 %v182, %v178
    %247 = vmatpush.bf16.msra.mxu0 %v211
    %248 = vmatpush.bf16.msra.mxu0 %v207
    %249 = vmatpush.bf16.msra.mxu0 %v203
    %250 = vmatpush.bf16.msra.mxu0 %v199
    %251 = vmatpush.bf16.msra.mxu0 %v195
    %252 = vmatpush.bf16.msra.mxu0 %v191
    %253 = vmatpush.bf16.msra.mxu0 %v187
    %254 = vmatpush.bf16.msra.mxu0 %v183
    %255 = vmatmul.bf16.gmra.mxu0 %v54
    %v256 = vpop.f32.mrf.mxu0
    %v257 = vadd.f32 0.0, %v256
    %v258 = vpop.f32.mrf.mxu0
    %v259 = vadd.f32 0.0, %v258
    %260 = vdwg.mxu0
    %261 = vmatpush.bf16.msra.mxu0 %v212
    %262 = vmatpush.bf16.msra.mxu0 %v208
    %263 = vmatpush.bf16.msra.mxu0 %v204
    %264 = vmatpush.bf16.msra.mxu0 %v200
    %265 = vmatpush.bf16.msra.mxu0 %v196
    %266 = vmatpush.bf16.msra.mxu0 %v192
    %267 = vmatpush.bf16.msra.mxu0 %v188
    %268 = vmatpush.bf16.msra.mxu0 %v184
    %269 = vmatmul.bf16.gmra.mxu0 %v54
    %v270 = vpop.f32.mrf.mxu0
    %v271 = vadd.f32 0.0, %v270
    %v272 = vpop.f32.mrf.mxu0
    %v273 = vadd.f32 0.0, %v272
    %274 = vdwg.mxu0
    %275 = vmatpush.bf16.msra.mxu0 %v213
    %276 = vmatpush.bf16.msra.mxu0 %v209
    %277 = vmatpush.bf16.msra.mxu0 %v205
    %278 = vmatpush.bf16.msra.mxu0 %v201
    %279 = vmatpush.bf16.msra.mxu0 %v197
    %280 = vmatpush.bf16.msra.mxu0 %v193
    %281 = vmatpush.bf16.msra.mxu0 %v189
    %282 = vmatpush.bf16.msra.mxu0 %v185
    %283 = vmatmul.bf16.gmra.mxu0 %v54
    %v284 = vpop.f32.mrf.mxu0
    %v285 = vadd.f32 0.0, %v284
    %v286 = vpop.f32.mrf.mxu0
    %v287 = vadd.f32 0.0, %v286
    %288 = vdwg.mxu0
    %289 = vmatpush.bf16.msra.mxu0 %v214
    %290 = vmatpush.bf16.msra.mxu0 %v210
    %291 = vmatpush.bf16.msra.mxu0 %v206
    %292 = vmatpush.bf16.msra.mxu0 %v202
    %293 = vmatpush.bf16.msra.mxu0 %v198
    %294 = vmatpush.bf16.msra.mxu0 %v194
    %295 = vmatpush.bf16.msra.mxu0 %v190
    %296 = vmatpush.bf16.msra.mxu0 %v186
    %297 = vmatmul.bf16.gmra.mxu0 %v54
    %v298 = vpop.f32.mrf.mxu0
    %v299 = vadd.f32 0.0, %v298
    %v300 = vpop.f32.mrf.mxu0
    %v301 = vadd.f32 0.0, %v300
    %302 = vdwg.mxu0
    %v303 = vmul.f32 %v257, 0.5
    %v304 = vmul.f32 %v271, 0.5
    %v305 = vmul.f32 %v285, 0.5
    %v306 = vmul.f32 %v299, 0.5
    %v307 = vmul.f32 %v259, 0.5
    %v308 = vmul.f32 %v273, 0.5
    %v309 = vmul.f32 %v287, 0.5
    %v310 = vmul.f32 %v301, 0.5
    %v311 = vmul.f32 %v257, 0.044715
    %v312 = vmul.f32 %v271, 0.044715
    %v313 = vmul.f32 %v285, 0.044715
    %v314 = vmul.f32 %v299, 0.044715
    %v315 = vmul.f32 %v259, 0.044715
    %v316 = vmul.f32 %v273, 0.044715
    %v317 = vmul.f32 %v287, 0.044715
    %v318 = vmul.f32 %v301, 0.044715
    %v319 = vmul.f32 %v311, %v257
    %v320 = vmul.f32 %v312, %v271
    %v321 = vmul.f32 %v313, %v285
    %v322 = vmul.f32 %v314, %v299
    %v323 = vmul.f32 %v315, %v259
    %v324 = vmul.f32 %v316, %v273
    %v325 = vmul.f32 %v317, %v287
    %v326 = vmul.f32 %v318, %v301
    %v327 = vmul.f32 %v319, %v257
    %v328 = vmul.f32 %v320, %v271
    %v329 = vmul.f32 %v321, %v285
    %v330 = vmul.f32 %v322, %v299
    %v331 = vmul.f32 %v323, %v259
    %v332 = vmul.f32 %v324, %v273
    %v333 = vmul.f32 %v325, %v287
    %v334 = vmul.f32 %v326, %v301
    %v335 = vadd.f32 %v257, %v327
    %v336 = vadd.f32 %v271, %v328
    %v337 = vadd.f32 %v285, %v329
    %v338 = vadd.f32 %v299, %v330
    %v339 = vadd.f32 %v259, %v331
    %v340 = vadd.f32 %v273, %v332
    %v341 = vadd.f32 %v287, %v333
    %v342 = vadd.f32 %v301, %v334
    %v343 = vmul.f32 %v335, 0.7978846
    %v344 = vmul.f32 %v336, 0.7978846
    %v345 = vmul.f32 %v337, 0.7978846
    %v346 = vmul.f32 %v338, 0.7978846
    %v347 = vmul.f32 %v339, 0.7978846
    %v348 = vmul.f32 %v340, 0.7978846
    %v349 = vmul.f32 %v341, 0.7978846
    %v350 = vmul.f32 %v342, 0.7978846
    %v351 = vtanh.pop %v343
    %v352 = vtanh.pop %v344
    %v353 = vtanh.pop %v345
    %v354 = vtanh.pop %v346
    %v355 = vtanh.pop %v347
    %v356 = vtanh.pop %v348
    %v357 = vtanh.pop %v349
    %v358 = vtanh.pop %v350
    %v359 = vadd.f32 %v351, 1.0
    %v360 = vadd.f32 %v352, 1.0
    %v361 = vadd.f32 %v353, 1.0
    %v362 = vadd.f32 %v354, 1.0
    %v363 = vadd.f32 %v355, 1.0
    %v364 = vadd.f32 %v356, 1.0
    %v365 = vadd.f32 %v357, 1.0
    %v366 = vadd.f32 %v358, 1.0
    %v367 = vmul.f32 %v303, %v359
    %v368 = vmul.f32 %v304, %v360
    %v369 = vmul.f32 %v305, %v361
    %v370 = vmul.f32 %v306, %v362
    %v371 = vmul.f32 %v307, %v363
    %v372 = vmul.f32 %v308, %v364
    %v373 = vmul.f32 %v309, %v365
    %v374 = vmul.f32 %v310, %v366
    %v375 = vld [vmem:[#allocation2] sm:$0xff]
    %v376 = vld [vmem:[#allocation2 + $0x8] sm:$0xff]
    %v377 = vpack.c.bf16 %v371, %v367
    %v378 = vpack.c.bf16 %v372, %v368
    %v379 = vpack.c.bf16 %v373, %v369
    %v380 = vpack.c.bf16 %v374, %v370
    %v381 = vld [vmem:[#allocation5] sm:$0xf]
    %v382 = vld [vmem:[#allocation5 + $0x4] sm:$0xf]
    %v383 = vld [vmem:[#allocation5 + $0x8] sm:$0xf]
    %v384 = vld [vmem:[#allocation5 + $0xc] sm:$0xf]
    %v385 = vld [vmem:[#allocation5 + $0x10] sm:$0xf]
    %v386 = vld [vmem:[#allocation5 + $0x14] sm:$0xf]
    %v387 = vld [vmem:[#allocation5 + $0x18] sm:$0xf]
    %v388 = vld [vmem:[#allocation5 + $0x1c] sm:$0xf]
    %v389 = vld [vmem:[#allocation5 + $0x20] sm:$0xf]
    %v390 = vld [vmem:[#allocation5 + $0x24] sm:$0xf]
    %v391 = vld [vmem:[#allocation5 + $0x28] sm:$0xf]
    %v392 = vld [vmem:[#allocation5 + $0x2c] sm:$0xf]
    %v393 = vld [vmem:[#allocation5 + $0x30] sm:$0xf]
    %v394 = vld [vmem:[#allocation5 + $0x34] sm:$0xf]
    %v395 = vld [vmem:[#allocation5 + $0x38] sm:$0xf]
    %v396 = vld [vmem:[#allocation5 + $0x3c] sm:$0xf]
    %v397 = vld [vmem:[#allocation5 + $0x40] sm:$0xf]
    %v398 = vld [vmem:[#allocation5 + $0x44] sm:$0xf]
    %v399 = vld [vmem:[#allocation5 + $0x48] sm:$0xf]
    %v400 = vld [vmem:[#allocation5 + $0x4c] sm:$0xf]
    %v401 = vld [vmem:[#allocation5 + $0x50] sm:$0xf]
    %v402 = vld [vmem:[#allocation5 + $0x54] sm:$0xf]
    %v403 = vld [vmem:[#allocation5 + $0x58] sm:$0xf]
    %v404 = vld [vmem:[#allocation5 + $0x5c] sm:$0xf]
    %v405 = vld [vmem:[#allocation5 + $0x60] sm:$0xf]
    %v406 = vld [vmem:[#allocation5 + $0x64] sm:$0xf]
    %v407 = vld [vmem:[#allocation5 + $0x68] sm:$0xf]
    %v408 = vld [vmem:[#allocation5 + $0x6c] sm:$0xf]
    %v409 = vld [vmem:[#allocation5 + $0x70] sm:$0xf]
    %v410 = vld [vmem:[#allocation5 + $0x74] sm:$0xf]
    %v411 = vld [vmem:[#allocation5 + $0x78] sm:$0xf]
    %v412 = vld [vmem:[#allocation5 + $0x7c] sm:$0xf]
    %v413 = vld [vmem:[#allocation5 + $0x80] sm:$0xf]
    %v414 = vld [vmem:[#allocation5 + $0x84] sm:$0xf]
    %v415 = vld [vmem:[#allocation5 + $0x88] sm:$0xf]
    %v416 = vld [vmem:[#allocation5 + $0x8c] sm:$0xf]
    %v417 = vld [vmem:[#allocation5 + $0x90] sm:$0xf]
    %v418 = vld [vmem:[#allocation5 + $0x94] sm:$0xf]
    %v419 = vld [vmem:[#allocation5 + $0x98] sm:$0xf]
    %v420 = vld [vmem:[#allocation5 + $0x9c] sm:$0xf]
    %v421 = vld [vmem:[#allocation5 + $0xa0] sm:$0xf]
    %v422 = vld [vmem:[#allocation5 + $0xa4] sm:$0xf]
    %v423 = vld [vmem:[#allocation5 + $0xa8] sm:$0xf]
    %v424 = vld [vmem:[#allocation5 + $0xac] sm:$0xf]
    %v425 = vld [vmem:[#allocation5 + $0xb0] sm:$0xf]
    %v426 = vld [vmem:[#allocation5 + $0xb4] sm:$0xf]
    %v427 = vld [vmem:[#allocation5 + $0xb8] sm:$0xf]
    %v428 = vld [vmem:[#allocation5 + $0xbc] sm:$0xf]
    %v429 = vld [vmem:[#allocation5 + $0xc0] sm:$0xf]
    %v430 = vld [vmem:[#allocation5 + $0xc4] sm:$0xf]
    %v431 = vld [vmem:[#allocation5 + $0xc8] sm:$0xf]
    %v432 = vld [vmem:[#allocation5 + $0xcc] sm:$0xf]
    %v433 = vld [vmem:[#allocation5 + $0xd0] sm:$0xf]
    %v434 = vld [vmem:[#allocation5 + $0xd4] sm:$0xf]
    %v435 = vld [vmem:[#allocation5 + $0xd8] sm:$0xf]
    %v436 = vld [vmem:[#allocation5 + $0xdc] sm:$0xf]
    %v437 = vld [vmem:[#allocation5 + $0xe0] sm:$0xf]
    %v438 = vld [vmem:[#allocation5 + $0xe4] sm:$0xf]
    %v439 = vld [vmem:[#allocation5 + $0xe8] sm:$0xf]
    %v440 = vld [vmem:[#allocation5 + $0xec] sm:$0xf]
    %v441 = vld [vmem:[#allocation5 + $0xf0] sm:$0xf]
    %v442 = vld [vmem:[#allocation5 + $0xf4] sm:$0xf]
    %v443 = vld [vmem:[#allocation5 + $0xf8] sm:$0xf]
    %v444 = vld [vmem:[#allocation5 + $0xfc] sm:$0xf]
    %v509 = vunpack.c.l.b16 %v381
    %v510 = vunpack.c.l.b16 %v382
    %v511 = vunpack.c.l.b16 %v383
    %v512 = vunpack.c.l.b16 %v384
    %v513 = vunpack.c.l.b16 %v385
    %v514 = vunpack.c.l.b16 %v386
    %v515 = vunpack.c.l.b16 %v387
    %v516 = vunpack.c.l.b16 %v388
    %v517 = vunpack.c.l.b16 %v389
    %v518 = vunpack.c.l.b16 %v390
    %v519 = vunpack.c.l.b16 %v391
    %v520 = vunpack.c.l.b16 %v392
    %v521 = vunpack.c.l.b16 %v393
    %v522 = vunpack.c.l.b16 %v394
    %v523 = vunpack.c.l.b16 %v395
    %v524 = vunpack.c.l.b16 %v396
    %v525 = vunpack.c.l.b16 %v397
    %v526 = vunpack.c.l.b16 %v398
    %v527 = vunpack.c.l.b16 %v399
    %v528 = vunpack.c.l.b16 %v400
    %v529 = vunpack.c.l.b16 %v401
    %v530 = vunpack.c.l.b16 %v402
    %v531 = vunpack.c.l.b16 %v403
    %v532 = vunpack.c.l.b16 %v404
    %v533 = vunpack.c.l.b16 %v405
    %v534 = vunpack.c.l.b16 %v406
    %v535 = vunpack.c.l.b16 %v407
    %v536 = vunpack.c.l.b16 %v408
    %v537 = vunpack.c.l.b16 %v409
    %v538 = vunpack.c.l.b16 %v410
    %v539 = vunpack.c.l.b16 %v411
    %v540 = vunpack.c.l.b16 %v412
    %v541 = vunpack.c.l.b16 %v413
    %v542 = vunpack.c.l.b16 %v414
    %v543 = vunpack.c.l.b16 %v415
    %v544 = vunpack.c.l.b16 %v416
    %v545 = vunpack.c.l.b16 %v417
    %v546 = vunpack.c.l.b16 %v418
    %v547 = vunpack.c.l.b16 %v419
    %v548 = vunpack.c.l.b16 %v420
    %v549 = vunpack.c.l.b16 %v421
    %v550 = vunpack.c.l.b16 %v422
    %v551 = vunpack.c.l.b16 %v423
    %v552 = vunpack.c.l.b16 %v424
    %v553 = vunpack.c.l.b16 %v425
    %v554 = vunpack.c.l.b16 %v426
    %v555 = vunpack.c.l.b16 %v427
    %v556 = vunpack.c.l.b16 %v428
    %v557 = vunpack.c.l.b16 %v429
    %v558 = vunpack.c.l.b16 %v430
    %v559 = vunpack.c.l.b16 %v431
    %v560 = vunpack.c.l.b16 %v432
    %v561 = vunpack.c.l.b16 %v433
    %v562 = vunpack.c.l.b16 %v434
    %v563 = vunpack.c.l.b16 %v435
    %v564 = vunpack.c.l.b16 %v436
    %v565 = vunpack.c.l.b16 %v437
    %v566 = vunpack.c.l.b16 %v438
    %v567 = vunpack.c.l.b16 %v439
    %v568 = vunpack.c.l.b16 %v440
    %v569 = vunpack.c.l.b16 %v441
    %v570 = vunpack.c.l.b16 %v442
    %v571 = vunpack.c.l.b16 %v443
    %v572 = vunpack.c.l.b16 %v444
    %v573 = vpack.c.b16 %v510, %v509
    %v574 = vpack.c.b16 %v512, %v511
    %v575 = vpack.c.b16 %v514, %v513
    %v576 = vpack.c.b16 %v516, %v515
    %v577 = vpack.c.b16 %v518, %v517
    %v578 = vpack.c.b16 %v520, %v519
    %v579 = vpack.c.b16 %v522, %v521
    %v580 = vpack.c.b16 %v524, %v523
    %v581 = vpack.c.b16 %v526, %v525
    %v582 = vpack.c.b16 %v528, %v527
    %v583 = vpack.c.b16 %v530, %v529
    %v584 = vpack.c.b16 %v532, %v531
    %v585 = vpack.c.b16 %v534, %v533
    %v586 = vpack.c.b16 %v536, %v535
    %v587 = vpack.c.b16 %v538, %v537
    %v588 = vpack.c.b16 %v540, %v539
    %v589 = vpack.c.b16 %v542, %v541
    %v590 = vpack.c.b16 %v544, %v543
    %v591 = vpack.c.b16 %v546, %v545
    %v592 = vpack.c.b16 %v548, %v547
    %v593 = vpack.c.b16 %v550, %v549
    %v594 = vpack.c.b16 %v552, %v551
    %v595 = vpack.c.b16 %v554, %v553
    %v596 = vpack.c.b16 %v556, %v555
    %v597 = vpack.c.b16 %v558, %v557
    %v598 = vpack.c.b16 %v560, %v559
    %v599 = vpack.c.b16 %v562, %v561
    %v600 = vpack.c.b16 %v564, %v563
    %v601 = vpack.c.b16 %v566, %v565
    %v602 = vpack.c.b16 %v568, %v567
    %v603 = vpack.c.b16 %v570, %v569
    %v604 = vpack.c.b16 %v572, %v571
    %637 = vmatpush.bf16.msra.mxu0 %v580
    %638 = vmatpush.bf16.msra.mxu0 %v579
    %639 = vmatpush.bf16.msra.mxu0 %v578
    %640 = vmatpush.bf16.msra.mxu0 %v577
    %641 = vmatpush.bf16.msra.mxu0 %v576
    %642 = vmatpush.bf16.msra.mxu0 %v575
    %643 = vmatpush.bf16.msra.mxu0 %v574
    %644 = vmatpush.bf16.msra.mxu0 %v573
    %645 = vmatmul.bf16.gmra.mxu0 %v377
    %v646 = vpop.f32.mrf.mxu0
    %v647 = vadd.f32 0.0, %v646
    %v648 = vpop.f32.mrf.mxu0
    %v649 = vadd.f32 0.0, %v648
    %650 = vdwg.mxu0
    %651 = vmatpush.bf16.msra.mxu0 %v588
    %652 = vmatpush.bf16.msra.mxu0 %v587
    %653 = vmatpush.bf16.msra.mxu0 %v586
    %654 = vmatpush.bf16.msra.mxu0 %v585
    %655 = vmatpush.bf16.msra.mxu0 %v584
    %656 = vmatpush.bf16.msra.mxu0 %v583
    %657 = vmatpush.bf16.msra.mxu0 %v582
    %658 = vmatpush.bf16.msra.mxu0 %v581
    %659 = vmatmul.bf16.gmra.mxu0 %v378
    %v660 = vpop.f32.mrf.mxu0
    %v661 = vadd.f32 %v647, %v660
    %v662 = vpop.f32.mrf.mxu0
    %v663 = vadd.f32 %v649, %v662
    %664 = vdwg.mxu0
    %665 = vmatpush.bf16.msra.mxu0 %v596
    %666 = vmatpush.bf16.msra.mxu0 %v595
    %667 = vmatpush.bf16.msra.mxu0 %v594
    %668 = vmatpush.bf16.msra.mxu0 %v593
    %669 = vmatpush.bf16.msra.mxu0 %v592
    %670 = vmatpush.bf16.msra.mxu0 %v591
    %671 = vmatpush.bf16.msra.mxu0 %v590
    %672 = vmatpush.bf16.msra.mxu0 %v589
    %673 = vmatmul.bf16.gmra.mxu0 %v379
    %v674 = vpop.f32.mrf.mxu0
    %v675 = vadd.f32 %v661, %v674
    %v676 = vpop.f32.mrf.mxu0
    %v677 = vadd.f32 %v663, %v676
    %678 = vdwg.mxu0
    %679 = vmatpush.bf16.msra.mxu0 %v604
    %680 = vmatpush.bf16.msra.mxu0 %v603
    %681 = vmatpush.bf16.msra.mxu0 %v602
    %682 = vmatpush.bf16.msra.mxu0 %v601
    %683 = vmatpush.bf16.msra.mxu0 %v600
    %684 = vmatpush.bf16.msra.mxu0 %v599
    %685 = vmatpush.bf16.msra.mxu0 %v598
    %686 = vmatpush.bf16.msra.mxu0 %v597
    %687 = vmatmul.bf16.gmra.mxu0 %v380
    %v688 = vpop.f32.mrf.mxu0
    %v689 = vadd.f32 %v675, %v688
    %v690 = vpop.f32.mrf.mxu0
    %v691 = vadd.f32 %v677, %v690
    %692 = vdwg.mxu0
    %v693 = vadd.f32 %v375, %v689
    %v694 = vadd.f32 %v376, %v691
    %695 = vst [vmem:[#allocation2] sm:$0xff] %v693
    %696 = vst [vmem:[#allocation2 + $0x8] sm:$0xff] %v694
    // Predicated region
    $region26: #{_mlp_forward_impl.1} parent=1 // pred_check
      %p697 = pneg %p46
    $region27: #{_mlp_forward_impl.1} parent=1 // pred_check_branch
      %699 = sbr.rel (%p697) target = $region29
    $region28: #{_mlp_forward_impl.1} parent=1 // pred_region
      %v700 = vld [vmem:[#allocation2] sm:$0xff]
      %v701 = vld [vmem:[#allocation2 + $0x8] sm:$0xff]
      %702 = vst [vmem:[%s3] sm:$0xff] %v700
      %703 = vst [vmem:[%s3 + $0x8] sm:$0xff] %v701
    $region29: #{_mlp_forward_impl.1} parent=1 // pred_fallthru
      _
    // Predicated region
    $region30: #{_mlp_forward_impl.1} parent=1 // pred_check
      _
    $region31: #{_mlp_forward_impl.1} parent=1 // pred_check_branch
      %705 = sbr.rel (0) target = $region33
    $region32: #{_mlp_forward_impl.1} parent=1 // pred_region
      _
    $region33: #{_mlp_forward_impl.1} parent=1 // pred_fallthru
      _
    // Predicated region
    $region34: #{_mlp_forward_impl.1} parent=1 // pred_check
      _
    $region35: #{_mlp_forward_impl.1} parent=1 // pred_check_branch
      %707 = sbr.rel (0) target = $region37
    $region36: #{_mlp_forward_impl.1} parent=1 // pred_region
      _
    $region37: #{_mlp_forward_impl.1} parent=1 // pred_fallthru
      _
    %708 = vsyncpa [#allocation4], 1
    %709 = vsyncpa [#allocation6], 1

</llo_original>
